<compile_context>
chip_gen: v7x
topology: tpu7x:2x2x1
jax: 0.10.0
libtpu: 0.0.40
codegen_flags: <defaults>
</compile_context>

<pallas_src>
from functools import partial

import jax
import jax.numpy as jnp
from jax import lax
from jax.experimental import pallas as pl
from jax.experimental.pallas import tpu as pltpu


def _round_up(x, m):
    return (x + m - 1) // m * m


def _margin_loss_kernel(v_ref, lab_ref, out_ref, *, n_valid, n_classes, tb,
                        lambda_, m1, m2):
    i = pl.program_id(0)

    # init the scalar accumulator on the first grid step
    @pl.when(i == 0)
    def _init():
        out_ref[...] = jnp.zeros_like(out_ref)

    v = v_ref[...].astype(jnp.float32)            # (TB, C)
    lab = lab_ref[...]                            # (TB, 1) int32

    # one-hot(labels) built in-kernel: compare against a lane iota
    class_ids = lax.broadcasted_iota(jnp.int32, (tb, n_classes), 1)
    one_hot = (lab == class_ids).astype(jnp.float32)          # (TB, C)

    v_norm = jnp.sqrt(v)
    pos = jnp.maximum(m1 - v_norm, 0.0)                       # relu(m1 - |v|)
    neg = jnp.maximum(v_norm - m2, 0.0)                       # relu(|v| - m2)
    loss = one_hot * pos + lambda_ * (1.0 - one_hot) * neg    # (TB, C)

    # mask rows introduced by batch padding
    row_ids = i * tb + lax.broadcasted_iota(jnp.int32, (tb, 1), 0)
    valid = (row_ids < n_valid).astype(jnp.float32)           # (TB, 1)
    loss = loss * valid

    # accumulate the per-tile sum into the resident (1,1) output block
    out_ref[...] += jnp.sum(loss)

    # finalize: divide by the true batch size (mean over batch)
    @pl.when(i == pl.num_programs(0) - 1)
    def _finalize():
        out_ref[...] = out_ref[...] * (1.0 / n_valid)


def margin_loss(v, labels, *, lambda_=0.5, m1=0.9, m2=0.1, block_b=1024):
    """v: (B, n_labels) non-negative, labels: (B,) int -> scalar loss (f32)."""
    assert v.ndim == 2, "v must be (batch, n_labels)"
    B, C = v.shape

    # batch tile: multiple of 8 sublanes, at most block_b rows per grid step
    tb = min(_round_up(block_b, 8), _round_up(B, 8))
    b_pad = _round_up(B, tb)
    num_tiles = b_pad // tb

    v_p = jnp.pad(v.astype(jnp.float32), ((0, b_pad - B), (0, 0)))
    lab_p = jnp.pad(labels.astype(jnp.int32), (0, b_pad - B)).reshape(b_pad, 1)

    kernel = partial(
        _margin_loss_kernel,
        n_valid=B, n_classes=C, tb=tb,
        lambda_=float(lambda_), m1=float(m1), m2=float(m2),
    )

    out = pl.pallas_call(
        kernel,
        out_shape=jax.ShapeDtypeStruct((1, 1), jnp.float32),
        grid_spec=pltpu.PrefetchScalarGridSpec(
            num_scalar_prefetch=0,
            grid=(num_tiles,),
            in_specs=[
                pl.BlockSpec((tb, C), lambda i: (i, 0)),   # v slab
                pl.BlockSpec((tb, 1), lambda i: (i, 0)),   # labels column
            ],
            out_specs=pl.BlockSpec((1, 1), lambda i: (0, 0)),
        ),
        compiler_params=pltpu.CompilerParams(
            dimension_semantics=("arbitrary",)),   # output block is a reduction
    )(v_p, lab_p)
    return out[0, 0]


# --- pure-JAX reference (mirrors the torch module) ----------------------------
def margin_loss_ref(v, labels, lambda_=0.5, m1=0.9, m2=0.1):
    n_labels = v.shape[1]
    v_norm = jnp.sqrt(v)
    one_hot = jax.nn.one_hot(labels, n_labels, dtype=v.dtype)
    loss = (one_hot * jnp.maximum(m1 - v_norm, 0.0)
            + lambda_ * (1.0 - one_hot) * jnp.maximum(v_norm - m2, 0.0))
    return loss.sum(axis=-1).mean()


if __name__ == "__main__":
    # small shapes consistent with the module: v = squared capsule norms
    # (batch, n_labels), labels = class indices.
    B, N_LABELS = 16, 10

    key = jax.random.PRNGKey(0)
    kv, kl = jax.random.split(key)
    v = jax.random.uniform(kv, (B, N_LABELS), dtype=jnp.float32)   # >= 0
    labels = jax.random.randint(kl, (B,), 0, N_LABELS, dtype=jnp.int32)

    # block_b=8 forces 2 grid steps at B=16, exercising the cross-step
    # accumulation + batch padding/masking path.
    loss = margin_loss(v, labels, block_b=8)
    loss = jax.block_until_ready(loss)

    ref = jax.block_until_ready(margin_loss_ref(v, labels))
    assert jnp.allclose(loss, ref, rtol=1e-5, atol=1e-6), \
        f"kernel={loss} ref={ref}"

    print("KERNEL_OK")
</pallas_src>

<mosaic_0001>
module attributes {stable_mosaic.version = 11 : i64} {
  func.func @_margin_loss_kernel(%arg0: i32, %arg1: memref<8x10xf32, #tpu.memory_space<vmem>>, %arg2: memref<8x1xi32, #tpu.memory_space<vmem>>, %arg3: memref<1x1xf32, #tpu.memory_space<vmem>>) attributes {dimension_semantics = [#tpu.dimension_semantics<arbitrary>], iteration_bounds = array<i64: 2>, scalar_prefetch = 0 : i64, scratch_operands = 0 : i64, tpu.core_type = #tpu.core_type<tc>, window_params = [{transform_indices = @transform_0, window_bounds = array<i64: 8, 10>}, {transform_indices = @transform_1, window_bounds = array<i64: 8, 1>}, {pipeline_mode = #tpu.pipeline_mode<synchronous>, transform_indices = @transform_2, window_bounds = array<i64: 1, 1>}]} {
    %c0_i32 = arith.constant 0 : i32
    %0 = arith.cmpi eq, %arg0, %c0_i32 : i32
    %1 = arith.extui %0 : i1 to i32
    %c0_i32_0 = arith.constant 0 : i32
    %2 = arith.cmpi ne, %1, %c0_i32_0 : i32
    scf.if %2 {
      %cst_15 = arith.constant 0.000000e+00 : f32
      %47 = vector.broadcast %cst_15 : f32 to vector<1x1xf32>
      %c0_16 = arith.constant 0 : index
      %c0_17 = arith.constant 0 : index
      %48 = vector.load %arg3[%c0_16, %c0_17] : memref<1x1xf32, #tpu.memory_space<vmem>>, vector<1x1xf32>
      tpu.vector_store %arg3[%c0_16, %c0_17], %47 {strides = array<i32>} : memref<1x1xf32, #tpu.memory_space<vmem>>, vector<1x1xf32>,
    } else {
    }
    %c0 = arith.constant 0 : index
    %c0_1 = arith.constant 0 : index
    %3 = vector.load %arg1[%c0, %c0_1] : memref<8x10xf32, #tpu.memory_space<vmem>>, vector<8x10xf32>
    %c0_2 = arith.constant 0 : index
    %c0_3 = arith.constant 0 : index
    %4 = vector.load %arg2[%c0_2, %c0_3] : memref<8x1xi32, #tpu.memory_space<vmem>>, vector<8x1xi32>
    %5 = tpu.iota {dimensions = array<i32: 1>} : vector<8x10xi32>
    %6 = vector.broadcast %4 : vector<8x1xi32> to vector<8x10xi32>
    %7 = arith.cmpi eq, %6, %5 : vector<8x10xi32>
    %8 = arith.extui %7 : vector<8x10xi1> to vector<8x10xi32>
    %9 = arith.sitofp %8 : vector<8x10xi32> to vector<8x10xf32>
    %10 = math.sqrt %3 : vector<8x10xf32>
    %cst = arith.constant 0.899999976 : f32
    %11 = vector.broadcast %cst : f32 to vector<8x10xf32>
    %12 = arith.subf %11, %10 : vector<8x10xf32>
    %cst_4 = arith.constant 0.000000e+00 : f32
    %13 = vector.broadcast %cst_4 : f32 to vector<8x10xf32>
    %14 = arith.maximumf %12, %13 : vector<8x10xf32>
    %cst_5 = arith.constant 1.000000e-01 : f32
    %15 = vector.broadcast %cst_5 : f32 to vector<8x10xf32>
    %16 = arith.subf %10, %15 : vector<8x10xf32>
    %cst_6 = arith.constant 0.000000e+00 : f32
    %17 = vector.broadcast %cst_6 : f32 to vector<8x10xf32>
    %18 = arith.maximumf %16, %17 : vector<8x10xf32>
    %19 = arith.mulf %9, %14 : vector<8x10xf32>
    %cst_7 = arith.constant 1.000000e+00 : f32
    %20 = vector.broadcast %cst_7 : f32 to vector<8x10xf32>
    %21 = arith.subf %20, %9 : vector<8x10xf32>
    %cst_8 = arith.constant 5.000000e-01 : f32
    %22 = vector.broadcast %cst_8 : f32 to vector<8x10xf32>
    %23 = arith.mulf %22, %21 : vector<8x10xf32>
    %24 = arith.mulf %23, %18 : vector<8x10xf32>
    %25 = arith.addf %19, %24 : vector<8x10xf32>
    %c8_i32 = arith.constant 8 : i32
    %26 = arith.muli %arg0, %c8_i32 : i32
    %27 = tpu.iota {dimensions = array<i32: 0>} : vector<8x1xi32>
    %28 = vector.broadcast %26 : i32 to vector<8x1xi32>
    %29 = arith.addi %28, %27 : vector<8x1xi32>
    %c16_i32 = arith.constant 16 : i32
    %30 = vector.broadcast %c16_i32 : i32 to vector<8x1xi32>
    %31 = arith.cmpi slt, %29, %30 : vector<8x1xi32>
    %32 = arith.extui %31 : vector<8x1xi1> to vector<8x1xi32>
    %33 = arith.sitofp %32 : vector<8x1xi32> to vector<8x1xf32>
    %34 = vector.broadcast %33 : vector<8x1xf32> to vector<8x10xf32>
    %35 = arith.mulf %25, %34 : vector<8x10xf32>
    %c0_9 = arith.constant 0 : index
    %c0_10 = arith.constant 0 : index
    %36 = vector.load %arg3[%c0_9, %c0_10] : memref<1x1xf32, #tpu.memory_space<vmem>>, vector<1x1xf32>
    %37 = vector.shape_cast %35 : vector<8x10xf32> to vector<1x8x10xf32>
    %cst_11 = arith.constant dense<0.000000e+00> : vector<1xf32>
    %38 = vector.multi_reduction <add>, %37, %cst_11 [1, 2] : vector<1x8x10xf32> to vector<1xf32>
    %39 = vector.shape_cast %38 : vector<1xf32> to vector<1x1x1xf32>
    %40 = vector.extract %39[0, 0, 0] : f32 from vector<1x1x1xf32>
    %41 = vector.broadcast %40 : f32 to vector<1x1xf32>
    %42 = arith.addf %36, %41 : vector<1x1xf32>
    %c0_12 = arith.constant 0 : index
    %c0_13 = arith.constant 0 : index
    %43 = vector.load %arg3[%c0_12, %c0_13] : memref<1x1xf32, #tpu.memory_space<vmem>>, vector<1x1xf32>
    tpu.vector_store %arg3[%c0_12, %c0_13], %42 {strides = array<i32>} : memref<1x1xf32, #tpu.memory_space<vmem>>, vector<1x1xf32>,
    %c1_i32 = arith.constant 1 : i32
    %44 = arith.cmpi eq, %arg0, %c1_i32 : i32
    %45 = arith.extui %44 : i1 to i32
    %c0_i32_14 = arith.constant 0 : i32
    %46 = arith.cmpi ne, %45, %c0_i32_14 : i32
    scf.if %46 {
      %c0_15 = arith.constant 0 : index
      %c0_16 = arith.constant 0 : index
      %47 = vector.load %arg3[%c0_15, %c0_16] : memref<1x1xf32, #tpu.memory_space<vmem>>, vector<1x1xf32>
      %cst_17 = arith.constant 6.250000e-02 : f32
      %48 = vector.broadcast %cst_17 : f32 to vector<1x1xf32>
      %49 = arith.mulf %47, %48 : vector<1x1xf32>
      %c0_18 = arith.constant 0 : index
      %c0_19 = arith.constant 0 : index
      %50 = vector.load %arg3[%c0_18, %c0_19] : memref<1x1xf32, #tpu.memory_space<vmem>>, vector<1x1xf32>
      tpu.vector_store %arg3[%c0_18, %c0_19], %49 {strides = array<i32>} : memref<1x1xf32, #tpu.memory_space<vmem>>, vector<1x1xf32>,
    } else {
    }
    return
  }
  func.func @transform_0(%arg0: i32) -> (i32, i32) {
    %c0_i32 = arith.constant 0 : i32
    %c0_i32_0 = arith.constant 0 : i32
    return %arg0, %c0_i32 : i32, i32
  }
  func.func @transform_1(%arg0: i32) -> (i32, i32) {
    %c0_i32 = arith.constant 0 : i32
    %c0_i32_0 = arith.constant 0 : i32
    return %arg0, %c0_i32 : i32, i32
  }
  func.func @transform_2(%arg0: i32) -> (i32, i32) {
    %c0_i32 = arith.constant 0 : i32
    %c0_i32_0 = arith.constant 0 : i32
    %c0_i32_1 = arith.constant 0 : i32
    return %c0_i32, %c0_i32_0 : i32, i32
  }
}

</mosaic_0001>

<llo_original>
// kernel: tpu_custom_call.1
$region0: #{tpu_custom_call.1}
  #allocation0 [shape = 'u32[]', space=smem, size = 0x4, offset = 0x4, fixed_abs, tag = 'smem constant byte address 0x4 - core index']
  #allocation1 [shape = 'u32[144,128]{1,0:T(1,128)}', space=vmem, size = 0x12000, scoped, tag = 'internal scratch']
  %s0 = inlined_call_operand.vmem [shape: f32[16,10], index: 0, kind: input, shape index: {}]
  %s1 = inlined_call_operand.vmem [shape: s32[16,1], index: 1, kind: input, shape index: {}]
  %s2 = inlined_call_operand.hbm [shape: f32[1,1], index: 2, kind: output, shape index: {}]
  %s3 = sld [smem:[#allocation0]]
  $region49: #{tpu_custom_call.1} parent=0
    _
  %s5 = ssub.s32 1, %s3
  %s6 = scalar_select 0, %s5, %s3
  $region1: #{tpu_custom_call.1} parent=0
    #allocation2 [shape = 'u8[512]{0}', space=vmem, size = 0x400, scoped, tag = 'output window, operand 0, single buffered']
    #allocation3 [shape = 's32[2]{0}', space=sflag, size = 0x8, scoped, tag = 'scoped memory for tpu_custom_call.1']
    %7 = vsyncpa [#allocation3], 0
    loop: start=0, step=1, limit=4
    $region2: #{tpu_custom_call.1} parent=1 // loop_pre_header
      _
    $region3: #{tpu_custom_call.1} parent=1 // loop_header
      %s9 = sphi 0, %s13
      %p10 = scmp.ge.s32.totalorder %s9, 4
      %s19 = sphi 0, %s21
      %s22 = sphi 0, %s19
      %s23 = sphi 0, %s22
      %s39 = sphi 0, %s23
      %s45 = sphi 0, %s47
      %s48 = sphi 0, %s45
      %s49 = sphi 0, %s48
      %s65 = sphi 0, %s49
      %s69 = sphi 0, %s69
      %s71 = sphi 0, %s69
      %s72 = sphi 0, %s71
      %s86 = sphi 0, %s72
    $region4: #{tpu_custom_call.1} parent=1 // loop_header_branch
      %12 = sbr.rel (%p10) target = $region8
    $region5: #{tpu_custom_call.1} parent=1 // loop_body
      %s14 = ssub.s32 %s9, 1
      %s15 = ssub.s32 %s9, 2
      %s16 = sadd.s32 %s9, 1
      %s17 = ssub.s32 %s9, %s16
      %p18 = scmp.eq.s32.totalorder %s17, 0
      %s20 = sadd.s32 %s19, 1
      %s21 = scalar_select %p18, %s19, %s20
      %p24 = pneg %p18
      %p25 = scmp.eq.s32.totalorder %s9, 1
      %p26 = por %p24, %p25
      %p27 = scmp.ne.s32.totalorder %s19, %s22
      %p28 = scmp.eq.s32.totalorder %s9, 0
      %p29 = por %p27, %p28
      %p30 = scmp.ne.s32.totalorder %s19, %s22
      %p31 = scmp.eq.s32.totalorder %s14, 1
      %p32 = por %p30, %p31
      %p33 = scmp.ne.s32.totalorder %s22, %s23
      %p34 = scmp.eq.s32.totalorder %s14, 0
      %p35 = por %p33, %p34
      %p36 = scmp.ne.s32.totalorder %s22, %s23
      %p37 = scmp.eq.s32.totalorder %s15, 1
      %p38 = por %p36, %p37
      %p40 = scmp.ne.s32.totalorder %s23, %s39
      %p41 = scmp.eq.s32.totalorder %s15, 0
      %p42 = por %p40, %p41
      %s43 = ssub.s32 %s9, %s16
      %p44 = scmp.eq.s32.totalorder %s43, 0
      %s46 = sadd.s32 %s45, 1
      %s47 = scalar_select %p44, %s45, %s46
      %p50 = pneg %p44
      %p51 = scmp.eq.s32.totalorder %s9, 1
      %p52 = por %p50, %p51
      %p53 = scmp.ne.s32.totalorder %s45, %s48
      %p54 = scmp.eq.s32.totalorder %s9, 0
      %p55 = por %p53, %p54
      %p56 = scmp.ne.s32.totalorder %s45, %s48
      %p57 = scmp.eq.s32.totalorder %s14, 1
      %p58 = por %p56, %p57
      %p59 = scmp.ne.s32.totalorder %s48, %s49
      %p60 = scmp.eq.s32.totalorder %s14, 0
      %p61 = por %p59, %p60
      %p62 = scmp.ne.s32.totalorder %s48, %s49
      %p63 = scmp.eq.s32.totalorder %s15, 1
      %p64 = por %p62, %p63
      %p66 = scmp.ne.s32.totalorder %s49, %s65
      %p67 = scmp.eq.s32.totalorder %s15, 0
      %p68 = por %p66, %p67
      %s70 = sadd.s32 %s69, 1
      %p73 = scmp.eq.s32.totalorder %s9, 1
      %p74 = scmp.ne.s32.totalorder %s69, %s71
      %p75 = scmp.eq.s32.totalorder %s9, 0
      %p76 = por %p74, %p75
      %p77 = scmp.ne.s32.totalorder %s69, %s71
      %p78 = scmp.eq.s32.totalorder %s14, 1
      %p79 = por %p77, %p78
      %p80 = scmp.ne.s32.totalorder %s71, %s72
      %p81 = scmp.eq.s32.totalorder %s14, 0
      %p82 = por %p80, %p81
      %p83 = scmp.ne.s32.totalorder %s71, %s72
      %p84 = scmp.eq.s32.totalorder %s15, 1
      %p85 = por %p83, %p84
      %p87 = scmp.ne.s32.totalorder %s72, %s86
      %p88 = scmp.eq.s32.totalorder %s15, 0
      %p89 = por %p87, %p88
      %p90 = scmp.le.s32.totalorder 1, %s9
      %p91 = scmp.lt.s32.totalorder %s9, 3
      %p92 = pnand %p90, %p91
      %p93 = pneg %p92
      // Predicated region
      $region9: #{tpu_custom_call.1} parent=5 // pred_check
        _
      $region10: #{tpu_custom_call.1} parent=5 // pred_check_branch
        %95 = sbr.rel (%p92) target = $region12
      $region11: #{tpu_custom_call.1} parent=5 // pred_region
        %s96 = ssub.s32 %s9, 1
      $region12: #{tpu_custom_call.1} parent=5 // pred_fallthru
        _
      %p97 = scmp.lt.s32.totalorder %s9, 2
      // Predicated region
      $region13: #{tpu_custom_call.1} parent=5 // pred_check
        %p98 = pneg %p97
      $region14: #{tpu_custom_call.1} parent=5 // pred_check_branch
        %100 = sbr.rel (%p98) target = $region16
      $region15: #{tpu_custom_call.1} parent=5 // pred_region
        // Predicated region
        $region17: #{tpu_custom_call.1} parent=15 // pred_check
          %p101 = pneg %p29
        $region18: #{tpu_custom_call.1} parent=15 // pred_check_branch
          %103 = sbr.rel (%p101) target = $region20
        $region19: #{tpu_custom_call.1} parent=15 // pred_region
          %p104 = scmp.lt.s32.totalorder %s9, 1
          %s105 = scalar_select %p104, %s9, 1
          %s106 = smul.addr %s105, 8
          %s107 = scalar_lea.vmem %s0, %s106
        $region20: #{tpu_custom_call.1} parent=15 // pred_fallthru
          _
        // Predicated region
        $region21: #{tpu_custom_call.1} parent=15 // pred_check
          %p108 = pneg %p55
        $region22: #{tpu_custom_call.1} parent=15 // pred_check_branch
          %110 = sbr.rel (%p108) target = $region24
        $region23: #{tpu_custom_call.1} parent=15 // pred_region
          %p111 = scmp.lt.s32.totalorder %s9, 1
          %s112 = scalar_select %p111, %s9, 1
          %s113 = smul.addr %s112, 8
          %s114 = scalar_lea.vmem %s1, %s113
        $region24: #{tpu_custom_call.1} parent=15 // pred_fallthru
          _
      $region16: #{tpu_custom_call.1} parent=5 // pred_fallthru
        _
      %p115 = scmp.le.s32.totalorder 1, %s9
      %p116 = scmp.lt.s32.totalorder %s9, 3
      %p117 = pnand %p115, %p116
      %p118 = pneg %p117
      // Predicated region
      $region25: #{tpu_custom_call.1} parent=5 // pred_check
        _
      $region26: #{tpu_custom_call.1} parent=5 // pred_check_branch
        %120 = sbr.rel (%p117) target = $region28
      $region27: #{tpu_custom_call.1} parent=5 // pred_region
        %s121 = ssub.s32 %s9, 1
        %p122 = scmp.lt.s32.totalorder %s14, 1
        %s123 = scalar_select %p122, %s14, 1
        %s124 = smul.addr %s123, 8
        %s125 = scalar_lea.vmem %s0, %s124
        %p126 = pneg %p35
        %p127 = pneg %p32
        %p128 = scmp.lt.s32.totalorder %s14, 1
        %s129 = scalar_select %p128, %s14, 1
        %s130 = smul.addr %s129, 8
        %s131 = scalar_lea.vmem %s1, %s130
        %p132 = pneg %p61
        %p133 = pneg %p58
        %p134 = pneg %p82
        %p135 = pneg %p79
        %p136 = scmp.lt.s32.totalorder %s14, 1
        %s137 = scalar_select %p136, %s14, 1
        %s138 = smul.addr %s137, 8
        %s139 = scalar_lea.vmem %s0, %s138
        %p140 = scmp.lt.s32.totalorder %s14, 1
        %s141 = scalar_select %p140, %s14, 1
        %s142 = smul.addr %s141, 8
        %s143 = scalar_lea.vmem %s1, %s142
        %p144 = scmp.eq.s32.totalorder %s14, 0
        // Predicated region
        $region29: #{tpu_custom_call.1} parent=27 // pred_check
          %p145 = pneg %p144
        $region30: #{tpu_custom_call.1} parent=27 // pred_check_branch
          %147 = sbr.rel (%p145) target = $region32
        $region31: #{tpu_custom_call.1} parent=27 // pred_region
          %vm148 = vcmask 0
          %149 = vst.msk [vmem:[#allocation2] sm:$0x1] %vm148, 0.0
        $region32: #{tpu_custom_call.1} parent=27 // pred_fallthru
          _
        %v150 = vld [vmem:[%s139] sm:$0xff]
        %v151 = vld [vmem:[%s143] sm:$0xff]
        %v152 = vlaneseq
        %v153 = vand.u32 %v152, 127
        %154 = vset.pattern.permute.xlu0 0
        %155 = vperm.xlu0 %154, %v151
        %v156 = vpop.permute.xlu0 %155
        %vm157 = vcmp.eq.s32.totalorder %v156, %v153
        %v158 = vsel %vm157, 1, 0
        %v159 = vcvt.s32.f32 %v158
        %v160 = vrsqrt.pop %v150
        %v161 = vmul.f32 %v150, %v160
        %vm162 = vcmp.eq.f32.partialorder %v150, inf
        %v163 = vsel %vm162, %v150, %v161
        %vm164 = vcmp.eq.f32.partialorder %v150, 0.0
        %v165 = vand.u32 %v150, 2147483648
        %v166 = vsel %vm164, %v165, %v163
        %v167 = vsub.f32 0.9, %v166
        %v168 = vmax.f32 %v167, 0.0
        %v169 = vsub.f32 %v166, 0.1
        %v170 = vmax.f32 %v169, 0.0
        %v171 = vmul.f32 %v159, %v168
        %v172 = vsub.f32 1.0, %v159
        %v173 = vmul.f32 %v172, 0.5
        %v174 = vmul.f32 %v173, %v170
        %v175 = vadd.f32 %v171, %v174
        %s176 = smul.u32 %s14, 8
        %v177 = vlaneseq
        %v178 = vshrl.u32 %v177, 7
        %v179 = vstv %s176
        %v180 = vadd.s32 %v179, %v178
        %vm181 = vcmp.lt.s32.totalorder %v180, 16
        %v182 = vsel %vm181, 1, 0
        %v183 = vcvt.s32.f32 %v182
        %v184 = vmul.f32 %v175, %v183
        %v185 = vld [vmem:[#allocation2] sm:$0x1]
        %vm186 = vcmask 80896
        %v187 = vsel %vm186, %v184, 0.0
        %188 = vadd.xlane.f32.xlu0 %v187
        %v189 = vpop.xlane.xlu0 %188
        %v190 = vrot.slane %v189, 4
        %v191 = vadd.f32 %v189, %v190
        %v192 = vrot.slane %v191, 2
        %v193 = vadd.f32 %v191, %v192
        %v194 = vrot.slane %v193, 1
        %v195 = vadd.f32 %v193, %v194
        %s196 = vtos %v195
        %v197 = vstv %s196
        %v198 = vadd.f32 %v185, %v197
        %vm199 = vcmask 0
        %200 = vst.msk [vmem:[#allocation2] sm:$0x1] %vm199, %v198
        %p201 = scmp.eq.s32.totalorder %s14, 1
        // Predicated region
        $region33: #{tpu_custom_call.1} parent=27 // pred_check
          %p202 = pneg %p201
        $region34: #{tpu_custom_call.1} parent=27 // pred_check_branch
          %204 = sbr.rel (%p202) target = $region36
        $region35: #{tpu_custom_call.1} parent=27 // pred_region
          %v205 = vld [vmem:[#allocation2] sm:$0x1]
          %v206 = vmul.f32 %v205, 0.0625
          %207 = vst.msk [vmem:[#allocation2] sm:$0x1] %vm199, %v206
        $region36: #{tpu_custom_call.1} parent=27 // pred_fallthru
          _
        // Predicated region
        $region37: #{tpu_custom_call.1} parent=27 // pred_check
          %p208 = pneg %p79
        $region38: #{tpu_custom_call.1} parent=27 // pred_check_branch
          %210 = sbr.rel (%p208) target = $region40
        $region39: #{tpu_custom_call.1} parent=27 // pred_region
          %s212 = ssub.s32 16, 16
          %213 = vsyncadd [#allocation3], %s212
          %s215 = sshll.u32 [#allocation2], 4
          %s216 = int_to_ptr.vmem [resolvable:$true] %s215
          %218 = dma.vmem_to_hbm [thread:$0]  %s216, 16, %s2, [#allocation3]
        $region40: #{tpu_custom_call.1} parent=27 // pred_fallthru
          _
        // Predicated region
        $region41: #{tpu_custom_call.1} parent=27 // pred_check
          %p219 = pneg %p79
        $region42: #{tpu_custom_call.1} parent=27 // pred_check_branch
          %221 = sbr.rel (%p219) target = $region44
        $region43: #{tpu_custom_call.1} parent=27 // pred_region
          %222 = dma.done [#allocation3], 16
        $region44: #{tpu_custom_call.1} parent=27 // pred_fallthru
          _
      $region28: #{tpu_custom_call.1} parent=5 // pred_fallthru
        _
      %p223 = scmp.le.s32.totalorder 2, %s9
      // Predicated region
      $region45: #{tpu_custom_call.1} parent=5 // pred_check
        %p224 = pneg %p223
      $region46: #{tpu_custom_call.1} parent=5 // pred_check_branch
        %226 = sbr.rel (%p224) target = $region48
      $region47: #{tpu_custom_call.1} parent=5 // pred_region
        %s227 = ssub.s32 %s9, 2
      $region48: #{tpu_custom_call.1} parent=5 // pred_fallthru
        _
    $region6: #{tpu_custom_call.1} parent=1 // loop_footer
      %s13 = sadd.s32 1, %s9
    $region7: #{tpu_custom_call.1} parent=1 // loop_footer_branch
      %8 = sbr.rel target = $region3
    $region8: #{tpu_custom_call.1} parent=1 // loop_exit
      _
    %228 = vsyncpa [#allocation3], 1
    %s229 = scalar_lea.sflag [#allocation3], 1
    %230 = vsyncpa %s229, 1

</llo_original>
